<compile_context>
chip_gen: v7x
topology: tpu7x:2x2x1
jax: 0.10.0
libtpu: 0.0.40
codegen_flags: <defaults>
</compile_context>

<pallas_src>
import jax
import jax.numpy as jnp
from jax.experimental import pallas as pl
from jax.experimental.pallas import tpu as pltpu


_LANES = 128


def _round_up(x, m):
    return ((x + m - 1) // m) * m


# ----------------------------- Pallas kernel -------------------------------

def _affine_kernel(x_ref, a_ref, b_ref, o_ref):
    # o = x * a + b   (a, b are [1, W] and broadcast over the batch rows)
    x = x_ref[...].astype(jnp.float32)
    o_ref[...] = (x * a_ref[...] + b_ref[...]).astype(o_ref.dtype)


def _apply_affine(x2d, a_row, b_row):
    """x2d: [B, W] (W multiple of 128). a_row/b_row: [1, W] f32 coefficients."""
    B, W = x2d.shape
    itemsize = jnp.dtype(x2d.dtype).itemsize
    # Min sublane tile: 8 rows for 4-byte dtypes, 16 for 2-byte, 32 for 1-byte.
    sub = {4: 8, 2: 16, 1: 32}.get(itemsize, 8)

    # ~2 MiB tiles: big enough to hit HBM roofline, small enough that
    # double-buffered in+out tiles (~8 MiB) fit every generation's scoped VMEM.
    target_bytes = 2 * 1024 * 1024
    tb = max(sub, (target_bytes // (W * itemsize)) // sub * sub)
    tb = min(tb, _round_up(B, sub))

    Bp = _round_up(B, tb)
    if Bp != B:
        x2d = jnp.pad(x2d, ((0, Bp - B), (0, 0)))

    grid = (pl.cdiv(Bp, tb),)
    out = pl.pallas_call(
        _affine_kernel,
        out_shape=jax.ShapeDtypeStruct((Bp, W), x2d.dtype),
        grid=grid,
        in_specs=[
            pl.BlockSpec((tb, W), lambda i: (i, 0)),
            pl.BlockSpec((1, W), lambda i: (0, 0)),
            pl.BlockSpec((1, W), lambda i: (0, 0)),
        ],
        out_specs=pl.BlockSpec((tb, W), lambda i: (i, 0)),
        compiler_params=pltpu.CompilerParams(
            dimension_semantics=("parallel",)),
    )(x2d, a_row, b_row)

    return out[:B] if Bp != B else out


# ----------------------------- Module wrapper -------------------------------

class LinearNormalizer:
    """JAX/Pallas port of the PyTorch LinearNormalizer forward pass."""

    def __init__(self):
        self.stats = {}

    def fit(self, data_dict):
        # Parameter setup / glue stays in plain JAX (matches PyTorch fit()).
        for key, tensor in data_dict.items():
            t = jnp.asarray(tensor, dtype=jnp.float32)
            min_value = jnp.min(t, axis=0)
            max_value = jnp.max(t, axis=0)
            diff = max_value - min_value
            constant_columns = diff == 0
            min_value = jnp.where(constant_columns, min_value - 1.0, min_value)
            max_value = jnp.where(constant_columns, max_value + 1.0, max_value)
            rng = max_value - min_value
            self.stats[key] = {
                "min": min_value,
                "max": max_value,
                # normalize: y = 2*(x - min)/rng - 1  ==  x*a + b
                "norm_scale": 2.0 / rng,
                "norm_offset": -2.0 * min_value / rng - 1.0,
                # denormalize: x = (y + 1)/2 * rng + min == y*(rng/2) + (max+min)/2
                "denorm_scale": rng * 0.5,
                "denorm_offset": rng * 0.5 + min_value,
            }

    def __call__(self, x, key, forward=True):
        stats = self.stats[key]
        a = (stats["norm_scale"] if forward else stats["denorm_scale"]).astype(jnp.float32)
        b = (stats["norm_offset"] if forward else stats["denorm_offset"]).astype(jnp.float32)
        D = a.shape[-1]

        orig_shape = x.shape
        x2d = x.reshape(-1, D)
        B = x2d.shape[0]

        # Make the last (lane) dim a multiple of 128 so stores are unmasked.
        if D % _LANES == 0:
            packed, W = 1, D
            xw, aw, bw = x2d, a.reshape(1, D), b.reshape(1, D)
        elif _LANES % D == 0 and B % (_LANES // D) == 0:
            packed = _LANES // D
            W = _LANES
            xw = x2d.reshape(B // packed, W)
            aw = jnp.tile(a, packed).reshape(1, W)
            bw = jnp.tile(b, packed).reshape(1, W)
        else:
            packed = 1
            W = _round_up(D, _LANES)
            xw = jnp.pad(x2d, ((0, 0), (0, W - D)))
            aw = jnp.pad(a, (0, W - D), constant_values=1.0).reshape(1, W)
            bw = jnp.pad(b, (0, W - D)).reshape(1, W)

        out = _apply_affine(xw, aw, bw)

        if packed > 1:
            out = out.reshape(B, D)
        elif W != D:
            out = out[:, :D]
        return out.reshape(orig_shape)


# --------------------------------- Main ------------------------------------

if __name__ == "__main__":
    key = jax.random.PRNGKey(0)
    k1, k2 = jax.random.split(key)

    B, D = 8, 32  # batch, feature dim (feature dim is last -> lanes)

    # Deterministic "dataset" used to fit stats, and an input to normalize.
    data = jax.random.uniform(k1, (64, D), dtype=jnp.float32, minval=-3.0, maxval=5.0)
    # Make one column constant to exercise the constant-column branch of fit().
    data = data.at[:, 3].set(1.5)

    x = jax.random.normal(k2, (B, D), dtype=jnp.float32)

    normalizer = LinearNormalizer()
    normalizer.fit({"action": data})

    # Forward (normalize)
    y = normalizer(x, "action", forward=True)
    y = jax.block_until_ready(y)

    # Inverse (denormalize) — round-trip check against plain JAX reference.
    x_rec = normalizer(y, "action", forward=False)
    x_rec = jax.block_until_ready(x_rec)

    mn = normalizer.stats["action"]["min"]
    mx = normalizer.stats["action"]["max"]
    y_ref = 2.0 * (x - mn) / (mx - mn) - 1.0

    assert jnp.allclose(y, y_ref, atol=1e-5, rtol=1e-5), "normalize mismatch"
    assert jnp.allclose(x_rec, x, atol=1e-4, rtol=1e-4), "round-trip mismatch"

    print("KERNEL_OK")
</pallas_src>

<mosaic_0001>
module attributes {stable_mosaic.version = 11 : i64} {
  func.func @_affine_kernel(%arg0: i32, %arg1: memref<8x128xf32, #tpu.memory_space<vmem>>, %arg2: memref<1x128xf32, #tpu.memory_space<vmem>>, %arg3: memref<1x128xf32, #tpu.memory_space<vmem>>, %arg4: memref<8x128xf32, #tpu.memory_space<vmem>>) attributes {dimension_semantics = [#tpu.dimension_semantics<parallel>], iteration_bounds = array<i64: 1>, scalar_prefetch = 0 : i64, scratch_operands = 0 : i64, tpu.core_type = #tpu.core_type<tc>, window_params = [{transform_indices = @transform_0, window_bounds = array<i64: 8, 128>}, {pipeline_mode = #tpu.pipeline_mode<synchronous>, transform_indices = @transform_1, window_bounds = array<i64: 1, 128>}, {pipeline_mode = #tpu.pipeline_mode<synchronous>, transform_indices = @transform_2, window_bounds = array<i64: 1, 128>}, {transform_indices = @transform_3, window_bounds = array<i64: 8, 128>}]} {
    %c0 = arith.constant 0 : index
    %c0_0 = arith.constant 0 : index
    %0 = vector.load %arg1[%c0, %c0_0] : memref<8x128xf32, #tpu.memory_space<vmem>>, vector<8x128xf32>
    %c0_1 = arith.constant 0 : index
    %c0_2 = arith.constant 0 : index
    %1 = vector.load %arg2[%c0_1, %c0_2] : memref<1x128xf32, #tpu.memory_space<vmem>>, vector<1x128xf32>
    %2 = vector.broadcast %1 : vector<1x128xf32> to vector<8x128xf32>
    %3 = arith.mulf %0, %2 : vector<8x128xf32>
    %c0_3 = arith.constant 0 : index
    %c0_4 = arith.constant 0 : index
    %4 = vector.load %arg3[%c0_3, %c0_4] : memref<1x128xf32, #tpu.memory_space<vmem>>, vector<1x128xf32>
    %5 = vector.broadcast %4 : vector<1x128xf32> to vector<8x128xf32>
    %6 = arith.addf %3, %5 : vector<8x128xf32>
    %c0_5 = arith.constant 0 : index
    %c0_6 = arith.constant 0 : index
    %7 = vector.load %arg4[%c0_5, %c0_6] : memref<8x128xf32, #tpu.memory_space<vmem>>, vector<8x128xf32>
    tpu.vector_store %arg4[%c0_5, %c0_6], %6 {strides = array<i32>} : memref<8x128xf32, #tpu.memory_space<vmem>>, vector<8x128xf32>,
    return
  }
  func.func @transform_0(%arg0: i32) -> (i32, i32) {
    %c0_i32 = arith.constant 0 : i32
    %c0_i32_0 = arith.constant 0 : i32
    return %arg0, %c0_i32 : i32, i32
  }
  func.func @transform_1(%arg0: i32) -> (i32, i32) {
    %c0_i32 = arith.constant 0 : i32
    %c0_i32_0 = arith.constant 0 : i32
    %c0_i32_1 = arith.constant 0 : i32
    return %c0_i32, %c0_i32_0 : i32, i32
  }
  func.func @transform_2(%arg0: i32) -> (i32, i32) {
    %c0_i32 = arith.constant 0 : i32
    %c0_i32_0 = arith.constant 0 : i32
    %c0_i32_1 = arith.constant 0 : i32
    return %c0_i32, %c0_i32_0 : i32, i32
  }
  func.func @transform_3(%arg0: i32) -> (i32, i32) {
    %c0_i32 = arith.constant 0 : i32
    %c0_i32_0 = arith.constant 0 : i32
    return %arg0, %c0_i32 : i32, i32
  }
}

</mosaic_0001>

<llo_original>
// kernel: tpu_custom_call.1
$region0: #{tpu_custom_call.1}
  #allocation0 [shape = 'u32[]', space=smem, size = 0x4, offset = 0x4, fixed_abs, tag = 'smem constant byte address 0x4 - core index']
  #allocation1 [shape = 'u32[144,128]{1,0:T(1,128)}', space=vmem, size = 0x12000, scoped, tag = 'internal scratch']
  %s0 = inlined_call_operand.hbm [shape: f32[8,128], index: 0, kind: input, shape index: {}]
  %s1 = inlined_call_operand.vmem [shape: f32[1,128], index: 1, kind: input, shape index: {}]
  %s2 = inlined_call_operand.vmem [shape: f32[1,128], index: 2, kind: input, shape index: {}]
  %s3 = inlined_call_operand.hbm [shape: f32[8,128], index: 3, kind: output, shape index: {}]
  %s4 = sld [smem:[#allocation0]]
  $region26: #{tpu_custom_call.1} parent=0
    _
  %s6 = ssub.s32 1, %s4
  %s7 = scalar_select 0, %s6, %s4
  $region1: #{tpu_custom_call.1} parent=0
    #allocation2 [shape = 'u8[4096]{0}', space=vmem, size = 0x1000, scoped, tag = 'input window, operand 0, single buffered']
    #allocation3 [shape = 's32[1]{0}', space=sflag, size = 0x4, scoped, tag = 'scoped memory for tpu_custom_call.1']
    #allocation4 [shape = 's32[1]{0}', space=sflag, size = 0x4, scoped, tag = 'scoped memory for tpu_custom_call.1']
    #allocation5 [shape = 'u8[4096]{0}', space=vmem, size = 0x1000, scoped, tag = 'output window, operand 0, single buffered']
    %8 = vsyncpa [#allocation3], 0
    %9 = vsyncpa [#allocation4], 0
    // Predicated region
    $region2: #{tpu_custom_call.1} parent=1 // pred_check
      _
    $region3: #{tpu_custom_call.1} parent=1 // pred_check_branch
      %11 = sbr.rel (0) target = $region5
    $region4: #{tpu_custom_call.1} parent=1 // pred_region
      %s13 = ssub.s32 128, 128
      %14 = vsyncadd [#allocation3], %s13
      %s16 = sshll.u32 [#allocation2], 4
      %s17 = int_to_ptr.vmem [resolvable:$true] %s16
      %19 = dma.hbm_to_vmem [thread:$0]  %s0, 128, %s17, [#allocation3]
    $region5: #{tpu_custom_call.1} parent=1 // pred_fallthru
      _
    // Predicated region
    $region6: #{tpu_custom_call.1} parent=1 // pred_check
      _
    $region7: #{tpu_custom_call.1} parent=1 // pred_check_branch
      %21 = sbr.rel (0) target = $region9
    $region8: #{tpu_custom_call.1} parent=1 // pred_region
      _
    $region9: #{tpu_custom_call.1} parent=1 // pred_fallthru
      _
    // Predicated region
    $region10: #{tpu_custom_call.1} parent=1 // pred_check
      _
    $region11: #{tpu_custom_call.1} parent=1 // pred_check_branch
      %23 = sbr.rel (0) target = $region13
    $region12: #{tpu_custom_call.1} parent=1 // pred_region
      _
    $region13: #{tpu_custom_call.1} parent=1 // pred_fallthru
      _
    // Predicated region
    $region14: #{tpu_custom_call.1} parent=1 // pred_check
      _
    $region15: #{tpu_custom_call.1} parent=1 // pred_check_branch
      %25 = sbr.rel (0) target = $region17
    $region16: #{tpu_custom_call.1} parent=1 // pred_region
      %26 = dma.done [#allocation3], 128
    $region17: #{tpu_custom_call.1} parent=1 // pred_fallthru
      _
    %v27 = vld [vmem:[#allocation2] sm:$0xff]
    %v28 = vld [vmem:[%s1] sm:$0x1]
    %v30 = vlaneseq
    %v31 = vshrl.u32 %v30, 7
    %v32 = vsub.s32 0, %v31
    %v33 = vrot.slane %v28, %v32
    %v35 = vmul.f32 %v27, %v33
    %v36 = vld [vmem:[%s2] sm:$0x1]
    %v38 = vlaneseq
    %v39 = vshrl.u32 %v38, 7
    %v40 = vsub.s32 0, %v39
    %v41 = vrot.slane %v36, %v40
    %v43 = vadd.f32 %v35, %v41
    %44 = vst [vmem:[#allocation5] sm:$0xff] %v43
    // Predicated region
    $region18: #{tpu_custom_call.1} parent=1 // pred_check
      _
    $region19: #{tpu_custom_call.1} parent=1 // pred_check_branch
      %46 = sbr.rel (0) target = $region21
    $region20: #{tpu_custom_call.1} parent=1 // pred_region
      %s48 = ssub.s32 128, 128
      %49 = vsyncadd [#allocation4], %s48
      %s51 = sshll.u32 [#allocation5], 4
      %s52 = int_to_ptr.vmem [resolvable:$true] %s51
      %54 = dma.vmem_to_hbm [thread:$0]  %s52, 128, %s3, [#allocation4]
    $region21: #{tpu_custom_call.1} parent=1 // pred_fallthru
      _
    // Predicated region
    $region22: #{tpu_custom_call.1} parent=1 // pred_check
      _
    $region23: #{tpu_custom_call.1} parent=1 // pred_check_branch
      %56 = sbr.rel (0) target = $region25
    $region24: #{tpu_custom_call.1} parent=1 // pred_region
      %57 = dma.done [#allocation4], 128
    $region25: #{tpu_custom_call.1} parent=1 // pred_fallthru
      _
    %58 = vsyncpa [#allocation3], 1
    %59 = vsyncpa [#allocation4], 1

</llo_original>
